<compile_context>
chip_gen: v7x
topology: tpu7x:2x2x1
jax: 0.10.0
libtpu: 0.0.40
codegen_flags: <defaults>
</compile_context>

<pallas_src>
import functools
import math

import jax
import jax.numpy as jnp
from jax.experimental import pallas as pl
from jax.experimental.pallas import tpu as pltpu


# ----------------------------------------------------------------------------
# "Module init": build the sinusoidal buffer exactly as the torch __init__.
# ----------------------------------------------------------------------------

def make_sinusoidal_pe(d_model, max_len=5000, dtype=jnp.float32):
    """Returns pe of shape (max_len, 1, d_model), matching register_buffer('pe')."""
    assert d_model % 2 == 0, "PositionalEncoding requires an even d_model"
    position = jnp.arange(max_len, dtype=jnp.float32)[:, None]               # (L, 1)
    div_term = jnp.exp(jnp.arange(0, d_model, 2, dtype=jnp.float32)
                       * (-math.log(10000.0) / d_model))                     # (D/2,)
    angles = position * div_term                                             # (L, D/2)
    pe = jnp.zeros((max_len, d_model), jnp.float32)
    pe = pe.at[:, 0::2].set(jnp.sin(angles))
    pe = pe.at[:, 1::2].set(jnp.cos(angles))
    return pe[:, None, :].astype(dtype)                                      # (L, 1, D)


# ----------------------------------------------------------------------------
# Pallas kernel: out[t, b*D + d] = x[t, b*D + d] + pe[t, d]
# ----------------------------------------------------------------------------

def _pos_enc_kernel(x_ref, pe_ref, o_ref, *, reps):
    # x: (tT, B*D), pe: (tT, D) when reps == B (lane-aligned D) else (tT, B*D).
    pe = pe_ref[...]
    if reps > 1:
        # Lane-aligned (D % 128 == 0) vreg copies; streams pe at 1/B of x traffic.
        pe = jnp.concatenate([pe] * reps, axis=-1)
    o_ref[...] = x_ref[...] + pe


def _round_up(n, m):
    return (n + m - 1) // m * m


def _choose_tile_t(T, B, D, itemsize, target_block_bytes=4 << 20):
    """Pick the T (sublane) tile from the PADDED VMEM footprint of one x block."""
    sub = 16 if itemsize < 4 else 8                       # sublane quantum per dtype
    padded_row_bytes = _round_up(B * D, 128) * itemsize   # lanes pad to 128
    tT = max(sub, (target_block_bytes // padded_row_bytes) // sub * sub)
    # Keep >=4 parallel tiles when T allows so v7x's two TensorCores both get work.
    if T >= 4 * sub:
        tT = min(tT, _round_up(pl.cdiv(T, 4), sub))
    return int(min(tT, T))


def positional_encoding_forward(x, pe, *, dropout_rate=0.1, training=False):
    """x: (T, B, d_model), pe: (max_len, 1, d_model) -> (T, B, d_model)."""
    T, B, D = x.shape
    assert pe.shape[0] >= T and pe.shape[2] == D

    # Cast the buffer to the activation dtype once, outside the kernel.
    # TODO(synk): torch promotes bf16 x + f32 buffer to f32; we keep x.dtype.
    pe_rows = pe[:T, 0, :].astype(x.dtype)                # (T, D)

    # Lane-dense 2D view: fold batch into the lane axis (free, row-major).
    x2 = x.reshape(T, B * D)

    if D % 128 == 0 and B > 1:
        # Stream compact pe and broadcast over B inside the kernel (aligned concat).
        pe_in, pe_lanes, reps = pe_rows, D, B
    else:
        # Small / unaligned D: pre-tile in plain JAX (pe bytes are negligible here)
        # to avoid an unaligned lane concat inside the kernel.
        pe_in = jnp.tile(pe_rows, (1, B)) if B > 1 else pe_rows
        pe_lanes, reps = B * D, 1

    tT = _choose_tile_t(T, B, D, x.dtype.itemsize)
    grid = (pl.cdiv(T, tT),)

    out2 = pl.pallas_call(
        functools.partial(_pos_enc_kernel, reps=reps),
        out_shape=jax.ShapeDtypeStruct((T, B * D), x.dtype),
        grid=grid,
        in_specs=[pl.BlockSpec((tT, B * D), lambda i: (i, 0)),
                  pl.BlockSpec((tT, pe_lanes), lambda i: (i, 0))],
        out_specs=pl.BlockSpec((tT, B * D), lambda i: (i, 0)),
        compiler_params=pltpu.CompilerParams(
            dimension_semantics=("parallel",),
            vmem_limit_bytes=32 * 1024 * 1024),
    )(x2, pe_in)

    # TODO(synk): nn.Dropout(p=dropout_rate) is identity in eval mode; stochastic
    # training-mode dropout (pltpu.prng_seed / prng_random_bits) is not implemented.
    del dropout_rate, training
    return out2.reshape(T, B, D)


# ----------------------------------------------------------------------------
# Example run
# ----------------------------------------------------------------------------

if __name__ == "__main__":
    key = jax.random.PRNGKey(0)
    k1, k2 = jax.random.split(key)

    # Small case consistent with the module's transformer usage: (seq, batch, d_model).
    d_model = 32
    pe = make_sinusoidal_pe(d_model, max_len=5000)
    x_small = jax.random.normal(k1, (16, 2, d_model), jnp.float32)
    y_small = positional_encoding_forward(x_small, pe)

    # Larger case that exercises the tiled, multi-step parallel grid and the
    # in-kernel pe broadcast path (D % 128 == 0).
    d_big = 256
    pe_big = make_sinusoidal_pe(d_big, max_len=2048)
    x_big = jax.random.normal(k2, (1024, 8, d_big), jnp.float32)
    y_big = positional_encoding_forward(x_big, pe_big)

    jax.block_until_ready((y_small, y_big))

    # Correctness vs. plain-JAX reference of the torch forward (eval mode).
    ref_small = x_small + pe[:x_small.shape[0]]
    ref_big = x_big + pe_big[:x_big.shape[0]]
    assert y_small.shape == x_small.shape
    assert y_big.shape == x_big.shape
    assert jnp.allclose(y_small, ref_small, atol=1e-6, rtol=1e-6)
    assert jnp.allclose(y_big, ref_big, atol=1e-6, rtol=1e-6)

    print("KERNEL_OK")
</pallas_src>

<mosaic_0001>
module attributes {stable_mosaic.version = 11 : i64} {
  func.func @_pos_enc_kernel(%arg0: i32, %arg1: memref<16x64xf32, #tpu.memory_space<vmem>>, %arg2: memref<16x64xf32, #tpu.memory_space<vmem>>, %arg3: memref<16x64xf32, #tpu.memory_space<vmem>>) attributes {dimension_semantics = [#tpu.dimension_semantics<parallel>], iteration_bounds = array<i64: 1>, scalar_prefetch = 0 : i64, scratch_operands = 0 : i64, tpu.core_type = #tpu.core_type<tc>, window_params = [{transform_indices = @transform_0, window_bounds = array<i64: 16, 64>}, {transform_indices = @transform_1, window_bounds = array<i64: 16, 64>}, {transform_indices = @transform_2, window_bounds = array<i64: 16, 64>}]} {
    %c0 = arith.constant 0 : index
    %c0_0 = arith.constant 0 : index
    %0 = vector.load %arg2[%c0, %c0_0] : memref<16x64xf32, #tpu.memory_space<vmem>>, vector<16x64xf32>
    %c0_1 = arith.constant 0 : index
    %c0_2 = arith.constant 0 : index
    %1 = vector.load %arg1[%c0_1, %c0_2] : memref<16x64xf32, #tpu.memory_space<vmem>>, vector<16x64xf32>
    %2 = arith.addf %1, %0 : vector<16x64xf32>
    %c0_3 = arith.constant 0 : index
    %c0_4 = arith.constant 0 : index
    %3 = vector.load %arg3[%c0_3, %c0_4] : memref<16x64xf32, #tpu.memory_space<vmem>>, vector<16x64xf32>
    tpu.vector_store %arg3[%c0_3, %c0_4], %2 {strides = array<i32>} : memref<16x64xf32, #tpu.memory_space<vmem>>, vector<16x64xf32>,
    return
  }
  func.func @transform_0(%arg0: i32) -> (i32, i32) {
    %c0_i32 = arith.constant 0 : i32
    %c0_i32_0 = arith.constant 0 : i32
    return %arg0, %c0_i32 : i32, i32
  }
  func.func @transform_1(%arg0: i32) -> (i32, i32) {
    %c0_i32 = arith.constant 0 : i32
    %c0_i32_0 = arith.constant 0 : i32
    return %arg0, %c0_i32 : i32, i32
  }
  func.func @transform_2(%arg0: i32) -> (i32, i32) {
    %c0_i32 = arith.constant 0 : i32
    %c0_i32_0 = arith.constant 0 : i32
    return %arg0, %c0_i32 : i32, i32
  }
}

</mosaic_0001>

<llo_original>
// kernel: tpu_custom_call.1
$region0: #{tpu_custom_call.1}
  #allocation0 [shape = 'u32[]', space=smem, size = 0x4, offset = 0x4, fixed_abs, tag = 'smem constant byte address 0x4 - core index']
  #allocation1 [shape = 'u32[144,128]{1,0:T(1,128)}', space=vmem, size = 0x12000, scoped, tag = 'internal scratch']
  %s0 = inlined_call_operand.hbm [shape: f32[16,64], index: 0, kind: input, shape index: {}]
  %s1 = inlined_call_operand.hbm [shape: f32[16,64], index: 1, kind: input, shape index: {}]
  %s2 = inlined_call_operand.hbm [shape: f32[16,64], index: 2, kind: output, shape index: {}]
  %s3 = sld [smem:[#allocation0]]
  $region26: #{tpu_custom_call.1} parent=0
    _
  %s5 = ssub.s32 1, %s3
  %s6 = scalar_select 0, %s5, %s3
  $region1: #{tpu_custom_call.1} parent=0
    #allocation2 [shape = 'u8[8192]{0}', space=vmem, size = 0x2000, scoped, tag = 'input window, operand 0, single buffered']
    #allocation3 [shape = 's32[1]{0}', space=sflag, size = 0x4, scoped, tag = 'scoped memory for tpu_custom_call.1']
    #allocation4 [shape = 's32[1]{0}', space=sflag, size = 0x4, scoped, tag = 'scoped memory for tpu_custom_call.1']
    #allocation5 [shape = 'u8[8192]{0}', space=vmem, size = 0x2000, scoped, tag = 'input window, operand 1, single buffered']
    #allocation6 [shape = 's32[1]{0}', space=sflag, size = 0x4, scoped, tag = 'scoped memory for tpu_custom_call.1']
    #allocation7 [shape = 'u8[8192]{0}', space=vmem, size = 0x2000, scoped, tag = 'output window, operand 0, single buffered']
    %7 = vsyncpa [#allocation3], 0
    %8 = vsyncpa [#allocation6], 0
    %9 = vsyncpa [#allocation4], 0
    // Predicated region
    $region2: #{tpu_custom_call.1} parent=1 // pred_check
      _
    $region3: #{tpu_custom_call.1} parent=1 // pred_check_branch
      %11 = sbr.rel (0) target = $region5
    $region4: #{tpu_custom_call.1} parent=1 // pred_region
      %s13 = ssub.s32 256, 256
      %14 = vsyncadd [#allocation3], %s13
      %s15 = sshll.u32 [#allocation2], 4
      %s16 = int_to_ptr.vmem [resolvable:$true] %s15
      %21 = dma.hbm_to_vmem [thread:$0]  %s0, 256, %s16, [#allocation3], 128, 128, 8
    $region5: #{tpu_custom_call.1} parent=1 // pred_fallthru
      _
    // Predicated region
    $region6: #{tpu_custom_call.1} parent=1 // pred_check
      _
    $region7: #{tpu_custom_call.1} parent=1 // pred_check_branch
      %23 = sbr.rel (0) target = $region9
    $region8: #{tpu_custom_call.1} parent=1 // pred_region
      %s25 = ssub.s32 256, 256
      %26 = vsyncadd [#allocation6], %s25
      %s27 = sshll.u32 [#allocation5], 4
      %s28 = int_to_ptr.vmem [resolvable:$true] %s27
      %33 = dma.hbm_to_vmem [thread:$0]  %s1, 256, %s28, [#allocation6], 128, 128, 8
    $region9: #{tpu_custom_call.1} parent=1 // pred_fallthru
      _
    // Predicated region
    $region10: #{tpu_custom_call.1} parent=1 // pred_check
      _
    $region11: #{tpu_custom_call.1} parent=1 // pred_check_branch
      %35 = sbr.rel (0) target = $region13
    $region12: #{tpu_custom_call.1} parent=1 // pred_region
      %36 = dma.done [#allocation3], 256
    $region13: #{tpu_custom_call.1} parent=1 // pred_fallthru
      _
    // Predicated region
    $region14: #{tpu_custom_call.1} parent=1 // pred_check
      _
    $region15: #{tpu_custom_call.1} parent=1 // pred_check_branch
      %38 = sbr.rel (0) target = $region17
    $region16: #{tpu_custom_call.1} parent=1 // pred_region
      %39 = dma.done [#allocation6], 256
    $region17: #{tpu_custom_call.1} parent=1 // pred_fallthru
      _
    %v40 = vld [vmem:[#allocation5] sm:$0xff]
    %v41 = vld [vmem:[#allocation5 + $0x8] sm:$0xff]
    %v42 = vld [vmem:[#allocation2] sm:$0xff]
    %v43 = vld [vmem:[#allocation2 + $0x8] sm:$0xff]
    %v44 = vadd.f32 %v42, %v40
    %v45 = vadd.f32 %v43, %v41
    %vm46 = vcmask 523264
    %47 = vst.msk [vmem:[#allocation7] sm:$0xff] %vm46, %v44
    %48 = vst.msk [vmem:[#allocation7 + $0x8] sm:$0xff] %vm46, %v45
    // Predicated region
    $region18: #{tpu_custom_call.1} parent=1 // pred_check
      _
    $region19: #{tpu_custom_call.1} parent=1 // pred_check_branch
      %50 = sbr.rel (0) target = $region21
    $region20: #{tpu_custom_call.1} parent=1 // pred_region
      %s52 = ssub.s32 256, 256
      %53 = vsyncadd [#allocation4], %s52
      %s54 = sshll.u32 [#allocation7], 4
      %s55 = int_to_ptr.vmem [resolvable:$true] %s54
      %60 = dma.vmem_to_hbm [thread:$0]  %s55, 256, %s2, [#allocation4], 128, 128, 8
    $region21: #{tpu_custom_call.1} parent=1 // pred_fallthru
      _
    // Predicated region
    $region22: #{tpu_custom_call.1} parent=1 // pred_check
      _
    $region23: #{tpu_custom_call.1} parent=1 // pred_check_branch
      %62 = sbr.rel (0) target = $region25
    $region24: #{tpu_custom_call.1} parent=1 // pred_region
      %63 = dma.done [#allocation4], 256
    $region25: #{tpu_custom_call.1} parent=1 // pred_fallthru
      _
    %64 = vsyncpa [#allocation3], 1
    %65 = vsyncpa [#allocation6], 1
    %66 = vsyncpa [#allocation4], 1

</llo_original>
